<compile_context>
chip_gen: v6e
topology: v6e:2x2x1
jax: 0.10.0
libtpu: 0.0.40
codegen_flags: <defaults>
</compile_context>

<pallas_src>
import math

import jax
import jax.numpy as jnp
from jax.experimental import pallas as pl
from jax.experimental.pallas import tpu as pltpu


def _round_up(x, m):
    return (x + m - 1) // m * m


def _cdiv(a, b):
    return -(-a // b)


def _vmem_capacity_bytes():
    """Physical VMEM per core; conservative fallback if the query fails."""
    try:
        info = pltpu.get_tpu_info()
        for attr in ("vmem_capacity_bytes", "vmem_size_bytes", "vmem_bytes"):
            v = getattr(info, attr, None)
            if v:
                return int(v)
    except Exception:
        pass
    return 64 * 1024 * 1024  # v7x per-TC VMEM; safe lower bound for v5e/v6e too


def _working_set_bytes(tm, tk, f_in_p, f_out_p, adj_bpe, x_bpe, w_bpe, out_bpe,
                       has_bias):
    ws = 2 * tm * tk * adj_bpe            # adj tile stream (double-buffered)
    ws += 2 * tk * f_in_p * x_bpe         # x tile stream (double-buffered)
    ws += 2 * f_in_p * f_out_p * w_bpe    # W (conservatively assume 2 buffers)
    if has_bias:
        ws += 2 * f_out_p * out_bpe       # bias
    ws += 2 * tm * f_out_p * out_bpe      # out tiles (double-buffered)
    ws += 2 * tm * f_in_p * out_bpe       # rep tiles (double-buffered)
    ws += tm * f_in_p * 4                 # f32 rep accumulator scratch
    return ws


def _gcn_kernel_bias(adj_ref, x_ref, w_ref, b_ref, out_ref, rep_ref, acc_ref):
    k = pl.program_id(1)

    @pl.when(k == 0)
    def _init():
        acc_ref[...] = jnp.zeros_like(acc_ref)

    # rep partial sum: adj row-slab (tm, tk) @ x slab (tk, f_in_p), f32 acc.
    acc_ref[...] += jnp.dot(adj_ref[...], x_ref[...],
                            preferred_element_type=jnp.float32)

    @pl.when(k == pl.num_programs(1) - 1)
    def _finalize():
        rep = acc_ref[...]
        rep_ref[...] = rep.astype(rep_ref.dtype)
        out = jnp.dot(rep, w_ref[...], preferred_element_type=jnp.float32)
        out_ref[...] = (out + b_ref[...].astype(jnp.float32)).astype(out_ref.dtype)


def _gcn_kernel_nobias(adj_ref, x_ref, w_ref, out_ref, rep_ref, acc_ref):
    k = pl.program_id(1)

    @pl.when(k == 0)
    def _init():
        acc_ref[...] = jnp.zeros_like(acc_ref)

    acc_ref[...] += jnp.dot(adj_ref[...], x_ref[...],
                            preferred_element_type=jnp.float32)

    @pl.when(k == pl.num_programs(1) - 1)
    def _finalize():
        rep = acc_ref[...]
        rep_ref[...] = rep.astype(rep_ref.dtype)
        out_ref[...] = jnp.dot(
            rep, w_ref[...], preferred_element_type=jnp.float32
        ).astype(out_ref.dtype)


def graph_convolution(adj, x, weight, bias=None, *, block_rows=256,
                      block_cols=None, compute_dtype=None):
    """Forward pass of GraphConvolution. Returns (output, representation_aft_fp).

    compute_dtype: optional dtype (e.g. jnp.bfloat16) for the streamed adj/x
    operands of the dominant matmul; accumulation stays f32. Default keeps the
    input dtype (exact semantics of the reference module).
    """
    n, f_in = x.shape
    f_out = weight.shape[1]
    assert adj.shape == (n, n)
    assert weight.shape == (f_in, f_out)

    out_dtype = x.dtype
    stream_dtype = compute_dtype if compute_dtype is not None else out_dtype

    # Lane-dense padded feature dims (multiples of 128 -> unmasked stores).
    f_in_p = _round_up(f_in, 128)
    f_out_p = _round_up(f_out, 128)

    adj_bpe = jnp.dtype(stream_dtype).itemsize
    x_bpe = jnp.dtype(stream_dtype).itemsize
    w_bpe = jnp.dtype(weight.dtype).itemsize
    out_bpe = jnp.dtype(out_dtype).itemsize
    has_bias = bias is not None

    # --- VMEM budget: scale off the real chip capacity, leave Mosaic headroom.
    capacity = _vmem_capacity_bytes()
    vmem_limit = int(min(0.85 * capacity, 120 * 1024 * 1024))
    budget = int(0.8 * vmem_limit)

    # --- Row tile: minimize row padding for awkward N (multiple of 8).
    n_row_blocks = max(1, _cdiv(n, block_rows))
    tm = _round_up(_cdiv(n, n_row_blocks), 8)
    n_rows_p = n_row_blocks * tm

    # --- K tile over adj columns / x rows (multiple of 128, lane-dense adj).
    tk_full = _round_up(n, 128)
    tk = tk_full if block_cols is None else min(_round_up(block_cols, 128), tk_full)
    while tk > 128 and _working_set_bytes(tm, tk, f_in_p, f_out_p, adj_bpe,
                                          x_bpe, w_bpe, out_bpe, has_bias) > budget:
        tk = _round_up(_cdiv(tk, 2), 128)
    while tm > 8 and _working_set_bytes(tm, tk, f_in_p, f_out_p, adj_bpe,
                                        x_bpe, w_bpe, out_bpe, has_bias) > budget:
        tm = max(8, _round_up(tm // 2, 8))
        n_rows_p = _round_up(n, tm)
    n_cols_p = _round_up(n, tk)

    def pad2(a, rows, cols):
        pr, pc = rows - a.shape[0], cols - a.shape[1]
        if pr == 0 and pc == 0:
            return a
        return jnp.pad(a, ((0, pr), (0, pc)))

    adj_p = pad2(adj.astype(stream_dtype), n_rows_p, n_cols_p)
    x_p = pad2(x.astype(stream_dtype), n_cols_p, f_in_p)
    w_p = pad2(weight, f_in_p, f_out_p)

    in_specs = [
        pl.BlockSpec((tm, tk), lambda i, k: (i, k)),            # adj (streamed)
        pl.BlockSpec((tk, f_in_p), lambda i, k: (k, 0)),        # x slab (streamed over k)
        pl.BlockSpec((f_in_p, f_out_p), lambda i, k: (0, 0)),   # W (constant block)
    ]
    inputs = [adj_p, x_p, w_p]

    if has_bias:
        b_p = jnp.zeros((1, f_out_p), dtype=weight.dtype)
        b_p = b_p.at[0, :f_out].set(bias.reshape(-1).astype(weight.dtype))
        in_specs.append(pl.BlockSpec((1, f_out_p), lambda i, k: (0, 0)))
        inputs.append(b_p)
        kernel = _gcn_kernel_bias
    else:
        kernel = _gcn_kernel_nobias

    out_p, rep_p = pl.pallas_call(
        kernel,
        out_shape=(
            jax.ShapeDtypeStruct((n_rows_p, f_out_p), out_dtype),
            jax.ShapeDtypeStruct((n_rows_p, f_in_p), out_dtype),
        ),
        grid_spec=pltpu.PrefetchScalarGridSpec(
            num_scalar_prefetch=0,
            grid=(n_rows_p // tm, n_cols_p // tk),
            in_specs=in_specs,
            out_specs=[
                pl.BlockSpec((tm, f_out_p), lambda i, k: (i, 0)),  # out rows
                pl.BlockSpec((tm, f_in_p), lambda i, k: (i, 0)),   # rep rows
            ],
            scratch_shapes=[pltpu.VMEM((tm, f_in_p), jnp.float32)],
        ),
        compiler_params=pltpu.CompilerParams(
            # Row blocks independent -> megacore split; K axis is a reduction.
            dimension_semantics=("parallel", "arbitrary"),
            vmem_limit_bytes=vmem_limit,
        ),
    )(*inputs)

    # Strip padding (padded rows/columns are exact zeros / unused).
    return out_p[:n, :f_out], rep_p[:n, :f_in]


def init_params(key, in_features, out_features, bias=True, dtype=jnp.float32):
    """Parameter init matching reset_parameters(): uniform(-stdv, stdv),
    stdv = 1/sqrt(out_features)."""
    stdv = 1.0 / math.sqrt(out_features)
    kw, kb = jax.random.split(key)
    weight = jax.random.uniform(
        kw, (in_features, out_features), dtype=dtype, minval=-stdv, maxval=stdv
    )
    b = None
    if bias:
        b = jax.random.uniform(
            kb, (out_features,), dtype=dtype, minval=-stdv, maxval=stdv
        )
    return weight, b


def _make_norm_adj(key, n):
    """Symmetric degree-normalized adjacency D^-1/2 (A+I) D^-1/2 (dense)."""
    raw = (jax.random.uniform(key, (n, n)) > 0.7).astype(jnp.float32)
    a = jnp.maximum(raw, raw.T) + jnp.eye(n, dtype=jnp.float32)
    deg = jnp.sum(a, axis=1)
    d_inv_sqrt = 1.0 / jnp.sqrt(deg)
    return a * d_inv_sqrt[:, None] * d_inv_sqrt[None, :]


if __name__ == "__main__":
    key = jax.random.PRNGKey(0)
    k_adj, k_x, k_p, k_adj2, k_x2 = jax.random.split(key, 5)

    # --- Case 1: module-implied small shapes, with bias -------------------
    N, F_IN, F_OUT = 16, 32, 64
    adj = _make_norm_adj(k_adj, N)
    x = jax.random.normal(k_x, (N, F_IN), dtype=jnp.float32)
    weight, bias = init_params(k_p, F_IN, F_OUT, bias=True)

    out, rep = graph_convolution(adj, x, weight, bias)
    jax.block_until_ready((out, rep))

    rep_ref = adj @ x
    out_ref = rep_ref @ weight + bias
    assert out.shape == (N, F_OUT) and rep.shape == (N, F_IN)
    assert jnp.allclose(rep, rep_ref, atol=1e-5, rtol=1e-5)
    assert jnp.allclose(out, out_ref, atol=1e-5, rtol=1e-5)

    # --- Case 2: non-aligned N, multi row-block grid, no bias -------------
    N2 = 300
    adj2 = _make_norm_adj(k_adj2, N2)
    x2 = jax.random.normal(k_x2, (N2, F_IN), dtype=jnp.float32)
    out2, rep2 = graph_convolution(adj2, x2, weight, None)
    jax.block_until_ready((out2, rep2))

    rep2_ref = adj2 @ x2
    out2_ref = rep2_ref @ weight
    assert out2.shape == (N2, F_OUT) and rep2.shape == (N2, F_IN)
    assert jnp.allclose(rep2, rep2_ref, atol=1e-4, rtol=1e-4)
    assert jnp.allclose(out2, out2_ref, atol=1e-4, rtol=1e-4)

    # --- Case 3: K-tiled accumulator path (forced small K tile), with bias
    out3, rep3 = graph_convolution(adj2, x2, weight, bias,
                                   block_rows=128, block_cols=128)
    jax.block_until_ready((out3, rep3))
    out3_ref = rep2_ref @ weight + bias
    assert jnp.allclose(rep3, rep2_ref, atol=1e-4, rtol=1e-4)
    assert jnp.allclose(out3, out3_ref, atol=1e-4, rtol=1e-4)

    # --- Case 4: bf16-streamed adj/x (mem-bound win), f32 accumulate ------
    out4, rep4 = graph_convolution(adj2, x2, weight, bias,
                                   compute_dtype=jnp.bfloat16)
    jax.block_until_ready((out4, rep4))
    assert jnp.allclose(rep4, rep2_ref, atol=3e-2, rtol=3e-2)
    assert jnp.allclose(out4, out3_ref, atol=3e-2, rtol=3e-2)

    print("KERNEL_OK")
</pallas_src>

<mosaic_0001>
module attributes {stable_mosaic.version = 11 : i64} {
  func.func @_gcn_kernel_bias(%arg0: i32, %arg1: i32, %arg2: memref<16x128xf32, #tpu.memory_space<vmem>>, %arg3: memref<128x128xf32, #tpu.memory_space<vmem>>, %arg4: memref<128x128xf32, #tpu.memory_space<vmem>>, %arg5: memref<1x128xf32, #tpu.memory_space<vmem>>, %arg6: memref<16x128xf32, #tpu.memory_space<vmem>>, %arg7: memref<16x128xf32, #tpu.memory_space<vmem>>, %arg8: memref<16x128xf32, #tpu.memory_space<vmem>>) attributes {dimension_semantics = [#tpu.dimension_semantics<parallel>, #tpu.dimension_semantics<arbitrary>], iteration_bounds = array<i64: 1, 1>, scalar_prefetch = 0 : i64, scratch_operands = 1 : i64, tpu.core_type = #tpu.core_type<tc>, window_params = [{transform_indices = @transform_0, window_bounds = array<i64: 16, 128>}, {transform_indices = @transform_1, window_bounds = array<i64: 128, 128>}, {pipeline_mode = #tpu.pipeline_mode<synchronous>, transform_indices = @transform_2, window_bounds = array<i64: 128, 128>}, {pipeline_mode = #tpu.pipeline_mode<synchronous>, transform_indices = @transform_3, window_bounds = array<i64: 1, 128>}, {transform_indices = @transform_4, window_bounds = array<i64: 16, 128>}, {transform_indices = @transform_5, window_bounds = array<i64: 16, 128>}]} {
    %c0_i32 = arith.constant 0 : i32
    %0 = arith.cmpi eq, %arg1, %c0_i32 : i32
    %1 = arith.extui %0 : i1 to i32
    %c0_i32_0 = arith.constant 0 : i32
    %2 = arith.cmpi ne, %1, %c0_i32_0 : i32
    scf.if %2 {
      %cst_10 = arith.constant 0.000000e+00 : f32
      %12 = vector.broadcast %cst_10 : f32 to vector<16x128xf32>
      %c0_11 = arith.constant 0 : index
      %c0_12 = arith.constant 0 : index
      %13 = vector.load %arg8[%c0_11, %c0_12] : memref<16x128xf32, #tpu.memory_space<vmem>>, vector<16x128xf32>
      tpu.vector_store %arg8[%c0_11, %c0_12], %12 {strides = array<i32>} : memref<16x128xf32, #tpu.memory_space<vmem>>, vector<16x128xf32>,
    } else {
    }
    %c0 = arith.constant 0 : index
    %c0_1 = arith.constant 0 : index
    %3 = vector.load %arg8[%c0, %c0_1] : memref<16x128xf32, #tpu.memory_space<vmem>>, vector<16x128xf32>
    %c0_2 = arith.constant 0 : index
    %c0_3 = arith.constant 0 : index
    %4 = vector.load %arg2[%c0_2, %c0_3] : memref<16x128xf32, #tpu.memory_space<vmem>>, vector<16x128xf32>
    %c0_4 = arith.constant 0 : index
    %c0_5 = arith.constant 0 : index
    %5 = vector.load %arg3[%c0_4, %c0_5] : memref<128x128xf32, #tpu.memory_space<vmem>>, vector<128x128xf32>
    %cst = arith.constant dense<0.000000e+00> : vector<16x128xf32>
    %6 = tpu.matmul %4, %5, %cst {dimension_numbers = #tpu.dot_dimension_numbers<[1], [0], [0], [1], [0, 0, 1, 1], [], []>} : vector<16x128xf32>, vector<128x128xf32>, vector<16x128xf32> -> vector<16x128xf32>
    %7 = arith.addf %3, %6 : vector<16x128xf32>
    %c0_6 = arith.constant 0 : index
    %c0_7 = arith.constant 0 : index
    %8 = vector.load %arg8[%c0_6, %c0_7] : memref<16x128xf32, #tpu.memory_space<vmem>>, vector<16x128xf32>
    tpu.vector_store %arg8[%c0_6, %c0_7], %7 {strides = array<i32>} : memref<16x128xf32, #tpu.memory_space<vmem>>, vector<16x128xf32>,
    %c0_i32_8 = arith.constant 0 : i32
    %9 = arith.cmpi eq, %arg1, %c0_i32_8 : i32
    %10 = arith.extui %9 : i1 to i32
    %c0_i32_9 = arith.constant 0 : i32
    %11 = arith.cmpi ne, %10, %c0_i32_9 : i32
    scf.if %11 {
      %c0_10 = arith.constant 0 : index
      %c0_11 = arith.constant 0 : index
      %12 = vector.load %arg8[%c0_10, %c0_11] : memref<16x128xf32, #tpu.memory_space<vmem>>, vector<16x128xf32>
      %c0_12 = arith.constant 0 : index
      %c0_13 = arith.constant 0 : index
      %13 = vector.load %arg7[%c0_12, %c0_13] : memref<16x128xf32, #tpu.memory_space<vmem>>, vector<16x128xf32>
      tpu.vector_store %arg7[%c0_12, %c0_13], %12 {strides = array<i32>} : memref<16x128xf32, #tpu.memory_space<vmem>>, vector<16x128xf32>,
      %c0_14 = arith.constant 0 : index
      %c0_15 = arith.constant 0 : index
      %14 = vector.load %arg4[%c0_14, %c0_15] : memref<128x128xf32, #tpu.memory_space<vmem>>, vector<128x128xf32>
      %cst_16 = arith.constant dense<0.000000e+00> : vector<16x128xf32>
      %15 = tpu.matmul %12, %14, %cst_16 {dimension_numbers = #tpu.dot_dimension_numbers<[1], [0], [0], [1], [0, 0, 1, 1], [], []>} : vector<16x128xf32>, vector<128x128xf32>, vector<16x128xf32> -> vector<16x128xf32>
      %c0_17 = arith.constant 0 : index
      %c0_18 = arith.constant 0 : index
      %16 = vector.load %arg5[%c0_17, %c0_18] : memref<1x128xf32, #tpu.memory_space<vmem>>, vector<1x128xf32>
      %17 = vector.broadcast %16 : vector<1x128xf32> to vector<16x128xf32>
      %18 = arith.addf %15, %17 : vector<16x128xf32>
      %c0_19 = arith.constant 0 : index
      %c0_20 = arith.constant 0 : index
      %19 = vector.load %arg6[%c0_19, %c0_20] : memref<16x128xf32, #tpu.memory_space<vmem>>, vector<16x128xf32>
      tpu.vector_store %arg6[%c0_19, %c0_20], %18 {strides = array<i32>} : memref<16x128xf32, #tpu.memory_space<vmem>>, vector<16x128xf32>,
    } else {
    }
    return
  }
  func.func @transform_0(%arg0: i32, %arg1: i32) -> (i32, i32) {
    %c0_i32 = arith.constant 0 : i32
    return %arg0, %arg1 : i32, i32
  }
  func.func @transform_1(%arg0: i32, %arg1: i32) -> (i32, i32) {
    %c0_i32 = arith.constant 0 : i32
    %c0_i32_0 = arith.constant 0 : i32
    return %arg1, %c0_i32 : i32, i32
  }
  func.func @transform_2(%arg0: i32, %arg1: i32) -> (i32, i32) {
    %c0_i32 = arith.constant 0 : i32
    %c0_i32_0 = arith.constant 0 : i32
    %c0_i32_1 = arith.constant 0 : i32
    return %c0_i32, %c0_i32_0 : i32, i32
  }
  func.func @transform_3(%arg0: i32, %arg1: i32) -> (i32, i32) {
    %c0_i32 = arith.constant 0 : i32
    %c0_i32_0 = arith.constant 0 : i32
    %c0_i32_1 = arith.constant 0 : i32
    return %c0_i32, %c0_i32_0 : i32, i32
  }
  func.func @transform_4(%arg0: i32, %arg1: i32) -> (i32, i32) {
    %c0_i32 = arith.constant 0 : i32
    %c0_i32_0 = arith.constant 0 : i32
    return %arg0, %c0_i32 : i32, i32
  }
  func.func @transform_5(%arg0: i32, %arg1: i32) -> (i32, i32) {
    %c0_i32 = arith.constant 0 : i32
    %c0_i32_0 = arith.constant 0 : i32
    return %arg0, %c0_i32 : i32, i32
  }
}

</mosaic_0001>

<llo_original>
// kernel: tpu_custom_call.1
$region0: #{tpu_custom_call.1}
  #allocation0 [shape = 'u32[]', space=smem, size = 0x4, offset = 0x4, fixed_abs, tag = 'smem constant byte address 0x4 - core index']
  #allocation1 [shape = 'u32[144,128]{1,0:T(1,128)}', space=vmem, size = 0x12000, scoped, tag = 'internal scratch']
  #allocation2 [shape = 'f32[16,128]{1,0:T(8,128)}', space=vmem, size = 0x2000, scoped, tag = 'scratch operand']
  %s0 = inlined_call_operand.hbm [shape: f32[16,128], index: 0, kind: input, shape index: {}]
  %s1 = inlined_call_operand.hbm [shape: f32[128,128], index: 1, kind: input, shape index: {}]
  %s2 = inlined_call_operand.hbm [shape: f32[128,128], index: 2, kind: input, shape index: {}]
  %s3 = inlined_call_operand.vmem [shape: f32[1,128], index: 3, kind: input, shape index: {}]
  %s4 = inlined_call_operand.hbm [shape: f32[16,128], index: 4, kind: output, shape index: {0}]
  %s5 = inlined_call_operand.hbm [shape: f32[16,128], index: 5, kind: output, shape index: {1}]
  %6 = xla_tuple %s4, %s5
  %s7 = sld [smem:[#allocation0]]
  $region54: #{tpu_custom_call.1} parent=0
    _
  %s9 = ssub.s32 1, %s7
  %s10 = scalar_select 0, %s9, %s7
  $region1: #{tpu_custom_call.1} parent=0
    #allocation3 [shape = 'u8[8192]{0}', space=vmem, size = 0x2000, scoped, tag = 'input window, operand 0, single buffered']
    #allocation4 [shape = 's32[1]{0}', space=sflag, size = 0x4, scoped, tag = 'scoped memory for tpu_custom_call.1']
    #allocation5 [shape = 's32[1]{0}', space=sflag, size = 0x4, scoped, tag = 'scoped memory for tpu_custom_call.1']
    #allocation6 [shape = 'u8[65536]{0}', space=vmem, size = 0x10000, scoped, tag = 'input window, operand 1, single buffered']
    #allocation7 [shape = 's32[1]{0}', space=sflag, size = 0x4, scoped, tag = 'scoped memory for tpu_custom_call.1']
    #allocation8 [shape = 'u8[65536]{0}', space=vmem, size = 0x10000, scoped, tag = 'input window, operand 2, single buffered']
    #allocation9 [shape = 'u8[8192]{0}', space=vmem, size = 0x2000, scoped, tag = 'output window, operand 0, single buffered']
    #allocation10 [shape = 'u8[8192]{0}', space=vmem, size = 0x2000, scoped, tag = 'output window, operand 1, single buffered']
    #allocation11 [shape = 's32[1]{0}', space=sflag, size = 0x4, scoped, tag = 'scoped memory for tpu_custom_call.1']
    %11 = vsyncpa [#allocation4], 0
    %12 = vsyncpa [#allocation7], 0
    %13 = vsyncpa [#allocation5], 0
    %14 = vsyncpa [#allocation11], 0
    // Predicated region
    $region2: #{tpu_custom_call.1} parent=1 // pred_check
      _
    $region3: #{tpu_custom_call.1} parent=1 // pred_check_branch
      %16 = sbr.rel (0) target = $region5
    $region4: #{tpu_custom_call.1} parent=1 // pred_region
      %s18 = ssub.s32 256, 256
      %19 = vsyncadd [#allocation4], %s18
      %s20 = sshll.u32 [#allocation3], 4
      %s21 = int_to_ptr.vmem [resolvable:$true] %s20
      %26 = dma.hbm_to_vmem [thread:$0]  %s0, 256, %s21, [#allocation4], 128, 128, 8
    $region5: #{tpu_custom_call.1} parent=1 // pred_fallthru
      _
    // Predicated region
    $region6: #{tpu_custom_call.1} parent=1 // pred_check
      _
    $region7: #{tpu_custom_call.1} parent=1 // pred_check_branch
      %28 = sbr.rel (0) target = $region9
    $region8: #{tpu_custom_call.1} parent=1 // pred_region
      %s30 = ssub.s32 2048, 2048
      %31 = vsyncadd [#allocation7], %s30
      %s32 = sshll.u32 [#allocation6], 4
      %s33 = int_to_ptr.vmem [resolvable:$true] %s32
      %38 = dma.hbm_to_vmem [thread:$0]  %s1, 2048, %s33, [#allocation7], 128, 128, 8
    $region9: #{tpu_custom_call.1} parent=1 // pred_fallthru
      _
    // Predicated region
    $region10: #{tpu_custom_call.1} parent=1 // pred_check
      _
    $region11: #{tpu_custom_call.1} parent=1 // pred_check_branch
      %40 = sbr.rel (0) target = $region13
    $region12: #{tpu_custom_call.1} parent=1 // pred_region
      %s42 = ssub.s32 2048, 2048
      %43 = vsyncadd [#allocation7], %s42
      %s44 = sshll.u32 [#allocation8], 4
      %s45 = int_to_ptr.vmem [resolvable:$true] %s44
      %50 = dma.hbm_to_vmem [thread:$0]  %s2, 2048, %s45, [#allocation7], 128, 128, 8
    $region13: #{tpu_custom_call.1} parent=1 // pred_fallthru
      _
    // Predicated region
    $region14: #{tpu_custom_call.1} parent=1 // pred_check
      _
    $region15: #{tpu_custom_call.1} parent=1 // pred_check_branch
      %52 = sbr.rel (0) target = $region17
    $region16: #{tpu_custom_call.1} parent=1 // pred_region
      _
    $region17: #{tpu_custom_call.1} parent=1 // pred_fallthru
      _
    // Predicated region
    $region18: #{tpu_custom_call.1} parent=1 // pred_check
      _
    $region19: #{tpu_custom_call.1} parent=1 // pred_check_branch
      %54 = sbr.rel (0) target = $region21
    $region20: #{tpu_custom_call.1} parent=1 // pred_region
      %55 = dma.done [#allocation4], 256
    $region21: #{tpu_custom_call.1} parent=1 // pred_fallthru
      _
    // Predicated region
    $region22: #{tpu_custom_call.1} parent=1 // pred_check
      _
    $region23: #{tpu_custom_call.1} parent=1 // pred_check_branch
      %57 = sbr.rel (0) target = $region25
    $region24: #{tpu_custom_call.1} parent=1 // pred_region
      %58 = dma.done [#allocation7], 2048
    $region25: #{tpu_custom_call.1} parent=1 // pred_fallthru
      _
    // Predicated region
    $region26: #{tpu_custom_call.1} parent=1 // pred_check
      _
    $region27: #{tpu_custom_call.1} parent=1 // pred_check_branch
      %60 = sbr.rel (0) target = $region29
    $region28: #{tpu_custom_call.1} parent=1 // pred_region
      %61 = dma.done [#allocation7], 2048
    $region29: #{tpu_custom_call.1} parent=1 // pred_fallthru
      _
    %p62 = scmp.eq.s32.totalorder 0, 0
    // Predicated region
    $region30: #{tpu_custom_call.1} parent=1 // pred_check
      %p63 = pneg %p62
    $region31: #{tpu_custom_call.1} parent=1 // pred_check_branch
      %65 = sbr.rel (%p63) target = $region33
    $region32: #{tpu_custom_call.1} parent=1 // pred_region
      %66 = vst [vmem:[#allocation2] sm:$0xff] 0.0
      %67 = vst [vmem:[#allocation2 + $0x8] sm:$0xff] 0.0
    $region33: #{tpu_custom_call.1} parent=1 // pred_fallthru
      _
    %v68 = vld [vmem:[#allocation2] sm:$0xff]
    %v69 = vld [vmem:[#allocation2 + $0x8] sm:$0xff]
    %v70 = vld [vmem:[#allocation3] sm:$0xff]
    %v71 = vld [vmem:[#allocation3 + $0x8] sm:$0xff]
    %v72 = vld [vmem:[#allocation6] sm:$0xff]
    %v73 = vld [vmem:[#allocation6 + $0x8] sm:$0xff]
    %v74 = vld [vmem:[#allocation6 + $0x10] sm:$0xff]
    %v75 = vld [vmem:[#allocation6 + $0x18] sm:$0xff]
    %v76 = vld [vmem:[#allocation6 + $0x20] sm:$0xff]
    %v77 = vld [vmem:[#allocation6 + $0x28] sm:$0xff]
    %v78 = vld [vmem:[#allocation6 + $0x30] sm:$0xff]
    %v79 = vld [vmem:[#allocation6 + $0x38] sm:$0xff]
    %v80 = vld [vmem:[#allocation6 + $0x40] sm:$0xff]
    %v81 = vld [vmem:[#allocation6 + $0x48] sm:$0xff]
    %v82 = vld [vmem:[#allocation6 + $0x50] sm:$0xff]
    %v83 = vld [vmem:[#allocation6 + $0x58] sm:$0xff]
    %v84 = vld [vmem:[#allocation6 + $0x60] sm:$0xff]
    %v85 = vld [vmem:[#allocation6 + $0x68] sm:$0xff]
    %v86 = vld [vmem:[#allocation6 + $0x70] sm:$0xff]
    %v87 = vld [vmem:[#allocation6 + $0x78] sm:$0xff]
    %88 = vmatprep.subr.mxu0 0.0
    %89 = vmatpush1.msra.mxu0 %v87
    %90 = vmatprep.subr.mxu0 0.0
    %91 = vmatpush1.msra.mxu0 %v86
    %92 = vmatprep.subr.mxu0 0.0
    %93 = vmatpush1.msra.mxu0 %v85
    %94 = vmatprep.subr.mxu0 0.0
    %95 = vmatpush1.msra.mxu0 %v84
    %96 = vmatprep.subr.mxu0 0.0
    %97 = vmatpush1.msra.mxu0 %v83
    %98 = vmatprep.subr.mxu0 0.0
    %99 = vmatpush1.msra.mxu0 %v82
    %100 = vmatprep.subr.mxu0 0.0
    %101 = vmatpush1.msra.mxu0 %v81
    %102 = vmatprep.subr.mxu0 0.0
    %103 = vmatpush1.msra.mxu0 %v80
    %104 = vmatprep.subr.mxu0 0.0
    %105 = vmatpush1.msra.mxu0 %v79
    %106 = vmatprep.subr.mxu0 0.0
    %107 = vmatpush1.msra.mxu0 %v78
    %108 = vmatprep.subr.mxu0 0.0
    %109 = vmatpush1.msra.mxu0 %v77
    %110 = vmatprep.subr.mxu0 0.0
    %111 = vmatpush1.msra.mxu0 %v76
    %112 = vmatprep.subr.mxu0 0.0
    %113 = vmatpush1.msra.mxu0 %v75
    %114 = vmatprep.subr.mxu0 0.0
    %115 = vmatpush1.msra.mxu0 %v74
    %116 = vmatprep.subr.mxu0 0.0
    %117 = vmatpush1.msra.mxu0 %v73
    %118 = vmatprep.subr.mxu0 0.0
    %119 = vmatpush1.msra.mxu0 %v72
    %120 = vmatprep.subr.mxu0 0.0
    %121 = vmatpush2.msra.mxu0 0.0
    %122 = vmatprep.subr.mxu0 0.0
    %123 = vmatpush2.msra.mxu0 0.0
    %124 = vmatprep.subr.mxu0 0.0
    %125 = vmatpush2.msra.mxu0 0.0
    %126 = vmatprep.subr.mxu0 0.0
    %127 = vmatpush2.msra.mxu0 0.0
    %128 = vmatprep.subr.mxu0 0.0
    %129 = vmatpush2.msra.mxu0 0.0
    %130 = vmatprep.subr.mxu0 0.0
    %131 = vmatpush2.msra.mxu0 0.0
    %132 = vmatprep.subr.mxu0 0.0
    %133 = vmatpush2.msra.mxu0 0.0
    %134 = vmatprep.subr.mxu0 0.0
    %135 = vmatpush2.msra.mxu0 0.0
    %136 = vmatprep.subr.mxu0 0.0
    %137 = vmatpush2.msra.mxu0 0.0
    %138 = vmatprep.subr.mxu0 0.0
    %139 = vmatpush2.msra.mxu0 0.0
    %140 = vmatprep.subr.mxu0 0.0
    %141 = vmatpush2.msra.mxu0 0.0
    %142 = vmatprep.subr.mxu0 0.0
    %143 = vmatpush2.msra.mxu0 0.0
    %144 = vmatprep.subr.mxu0 0.0
    %145 = vmatpush2.msra.mxu0 0.0
    %146 = vmatprep.subr.mxu0 0.0
    %147 = vmatpush2.msra.mxu0 0.0
    %148 = vmatprep.subr.mxu0 0.0
    %149 = vmatpush2.msra.mxu0 0.0
    %150 = vmatprep.subr.mxu0 0.0
    %151 = vmatpush2.msra.mxu0 0.0
    %152 = vmatprep.mubr.f32.mxu0 0.0
    %153 = vmatmul.mubr.f32.gmra.mxu0 %v70
    %v154 = vpop.f32.mrf.mxu0
    %v155 = vadd.f32 0.0, %v154
    %v156 = vpop.f32.mrf.mxu0
    %157 = vmatprep.mubr.f32.mxu0 0.0
    %158 = vmatmul.mubr.f32.gmra.mxu0 %v71
    %v159 = vpop.f32.mrf.mxu0
    %v160 = vadd.f32 0.0, %v159
    %v161 = vpop.f32.mrf.mxu0
    %162 = vdwg.mxu0
    %v163 = vadd.f32 %v68, %v155
    %v164 = vadd.f32 %v69, %v160
    %165 = vst [vmem:[#allocation2] sm:$0xff] %v163
    %166 = vst [vmem:[#allocation2 + $0x8] sm:$0xff] %v164
    // Predicated region
    $region34: #{tpu_custom_call.1} parent=1 // pred_check
      %p167 = pneg %p62
    $region35: #{tpu_custom_call.1} parent=1 // pred_check_branch
      %169 = sbr.rel (%p167) target = $region37
    $region36: #{tpu_custom_call.1} parent=1 // pred_region
      %v170 = vld [vmem:[#allocation2] sm:$0xff]
      %v171 = vld [vmem:[#allocation2 + $0x8] sm:$0xff]
      %172 = vst [vmem:[#allocation10] sm:$0xff] %v170
      %173 = vst [vmem:[#allocation10 + $0x8] sm:$0xff] %v171
      %v174 = vld [vmem:[#allocation8] sm:$0xff]
      %v175 = vld [vmem:[#allocation8 + $0x8] sm:$0xff]
      %v176 = vld [vmem:[#allocation8 + $0x10] sm:$0xff]
      %v177 = vld [vmem:[#allocation8 + $0x18] sm:$0xff]
      %v178 = vld [vmem:[#allocation8 + $0x20] sm:$0xff]
      %v179 = vld [vmem:[#allocation8 + $0x28] sm:$0xff]
      %v180 = vld [vmem:[#allocation8 + $0x30] sm:$0xff]
      %v181 = vld [vmem:[#allocation8 + $0x38] sm:$0xff]
      %v182 = vld [vmem:[#allocation8 + $0x40] sm:$0xff]
      %v183 = vld [vmem:[#allocation8 + $0x48] sm:$0xff]
      %v184 = vld [vmem:[#allocation8 + $0x50] sm:$0xff]
      %v185 = vld [vmem:[#allocation8 + $0x58] sm:$0xff]
      %v186 = vld [vmem:[#allocation8 + $0x60] sm:$0xff]
      %v187 = vld [vmem:[#allocation8 + $0x68] sm:$0xff]
      %v188 = vld [vmem:[#allocation8 + $0x70] sm:$0xff]
      %v189 = vld [vmem:[#allocation8 + $0x78] sm:$0xff]
      %v190 = vld [vmem:[%s3] sm:$0x1]
      %v192 = vlaneseq
      %v193 = vshrl.u32 %v192, 7
      %v194 = vsub.s32 0, %v193
      %v195 = vrot.slane %v190, %v194
      %197 = vmatprep.subr.mxu0 0.0
      %198 = vmatpush1.msra.mxu0 %v189
      %199 = vmatprep.subr.mxu0 0.0
      %200 = vmatpush1.msra.mxu0 %v188
      %201 = vmatprep.subr.mxu0 0.0
      %202 = vmatpush1.msra.mxu0 %v187
      %203 = vmatprep.subr.mxu0 0.0
      %204 = vmatpush1.msra.mxu0 %v186
      %205 = vmatprep.subr.mxu0 0.0
      %206 = vmatpush1.msra.mxu0 %v185
      %207 = vmatprep.subr.mxu0 0.0
      %208 = vmatpush1.msra.mxu0 %v184
      %209 = vmatprep.subr.mxu0 0.0
      %210 = vmatpush1.msra.mxu0 %v183
      %211 = vmatprep.subr.mxu0 0.0
      %212 = vmatpush1.msra.mxu0 %v182
      %213 = vmatprep.subr.mxu0 0.0
      %214 = vmatpush1.msra.mxu0 %v181
      %215 = vmatprep.subr.mxu0 0.0
      %216 = vmatpush1.msra.mxu0 %v180
      %217 = vmatprep.subr.mxu0 0.0
      %218 = vmatpush1.msra.mxu0 %v179
      %219 = vmatprep.subr.mxu0 0.0
      %220 = vmatpush1.msra.mxu0 %v178
      %221 = vmatprep.subr.mxu0 0.0
      %222 = vmatpush1.msra.mxu0 %v177
      %223 = vmatprep.subr.mxu0 0.0
      %224 = vmatpush1.msra.mxu0 %v176
      %225 = vmatprep.subr.mxu0 0.0
      %226 = vmatpush1.msra.mxu0 %v175
      %227 = vmatprep.subr.mxu0 0.0
      %228 = vmatpush1.msra.mxu0 %v174
      %229 = vmatprep.subr.mxu0 0.0
      %230 = vmatpush2.msra.mxu0 0.0
      %231 = vmatprep.subr.mxu0 0.0
      %232 = vmatpush2.msra.mxu0 0.0
      %233 = vmatprep.subr.mxu0 0.0
      %234 = vmatpush2.msra.mxu0 0.0
      %235 = vmatprep.subr.mxu0 0.0
      %236 = vmatpush2.msra.mxu0 0.0
      %237 = vmatprep.subr.mxu0 0.0
      %238 = vmatpush2.msra.mxu0 0.0
      %239 = vmatprep.subr.mxu0 0.0
      %240 = vmatpush2.msra.mxu0 0.0
      %241 = vmatprep.subr.mxu0 0.0
      %242 = vmatpush2.msra.mxu0 0.0
      %243 = vmatprep.subr.mxu0 0.0
      %244 = vmatpush2.msra.mxu0 0.0
      %245 = vmatprep.subr.mxu0 0.0
      %246 = vmatpush2.msra.mxu0 0.0
      %247 = vmatprep.subr.mxu0 0.0
      %248 = vmatpush2.msra.mxu0 0.0
      %249 = vmatprep.subr.mxu0 0.0
      %250 = vmatpush2.msra.mxu0 0.0
      %251 = vmatprep.subr.mxu0 0.0
      %252 = vmatpush2.msra.mxu0 0.0
      %253 = vmatprep.subr.mxu0 0.0
      %254 = vmatpush2.msra.mxu0 0.0
      %255 = vmatprep.subr.mxu0 0.0
      %256 = vmatpush2.msra.mxu0 0.0
      %257 = vmatprep.subr.mxu0 0.0
      %258 = vmatpush2.msra.mxu0 0.0
      %259 = vmatprep.subr.mxu0 0.0
      %260 = vmatpush2.msra.mxu0 0.0
      %261 = vmatprep.mubr.f32.mxu0 0.0
      %262 = vmatmul.mubr.f32.gmra.mxu0 %v170
      %v263 = vpop.f32.mrf.mxu0
      %v264 = vadd.f32 %v195, %v263
      %v265 = vpop.f32.mrf.mxu0
      %266 = vmatprep.mubr.f32.mxu0 0.0
      %267 = vmatmul.mubr.f32.gmra.mxu0 %v171
      %v268 = vpop.f32.mrf.mxu0
      %v269 = vadd.f32 %v195, %v268
      %v270 = vpop.f32.mrf.mxu0
      %271 = vdwg.mxu0
      %272 = vst [vmem:[#allocation9] sm:$0xff] %v264
      %273 = vst [vmem:[#allocation9 + $0x8] sm:$0xff] %v269
    $region37: #{tpu_custom_call.1} parent=1 // pred_fallthru
      _
    // Predicated region
    $region38: #{tpu_custom_call.1} parent=1 // pred_check
      _
    $region39: #{tpu_custom_call.1} parent=1 // pred_check_branch
      %275 = sbr.rel (0) target = $region41
    $region40: #{tpu_custom_call.1} parent=1 // pred_region
      %s277 = ssub.s32 256, 256
      %278 = vsyncadd [#allocation5], %s277
      %s279 = sshll.u32 [#allocation9], 4
      %s280 = int_to_ptr.vmem [resolvable:$true] %s279
      %285 = dma.vmem_to_hbm [thread:$0]  %s280, 256, %s4, [#allocation5], 128, 128, 8
    $region41: #{tpu_custom_call.1} parent=1 // pred_fallthru
      _
    // Predicated region
    $region42: #{tpu_custom_call.1} parent=1 // pred_check
      _
    $region43: #{tpu_custom_call.1} parent=1 // pred_check_branch
      %287 = sbr.rel (0) target = $region45
    $region44: #{tpu_custom_call.1} parent=1 // pred_region
      %s289 = ssub.s32 256, 256
      %290 = vsyncadd [#allocation11], %s289
      %s291 = sshll.u32 [#allocation10], 4
      %s292 = int_to_ptr.vmem [resolvable:$true] %s291
      %297 = dma.vmem_to_hbm [thread:$0]  %s292, 256, %s5, [#allocation11], 128, 128, 8
    $region45: #{tpu_custom_call.1} parent=1 // pred_fallthru
      _
    // Predicated region
    $region46: #{tpu_custom_call.1} parent=1 // pred_check
      _
    $region47: #{tpu_custom_call.1} parent=1 // pred_check_branch
      %299 = sbr.rel (0) target = $region49
    $region48: #{tpu_custom_call.1} parent=1 // pred_region
      %300 = dma.done [#allocation5], 256
    $region49: #{tpu_custom_call.1} parent=1 // pred_fallthru
      _
    // Predicated region
    $region50: #{tpu_custom_call.1} parent=1 // pred_check
      _
    $region51: #{tpu_custom_call.1} parent=1 // pred_check_branch
      %302 = sbr.rel (0) target = $region53
    $region52: #{tpu_custom_call.1} parent=1 // pred_region
      %303 = dma.done [#allocation11], 256
    $region53: #{tpu_custom_call.1} parent=1 // pred_fallthru
      _
    %304 = vsyncpa [#allocation4], 1
    %305 = vsyncpa [#allocation7], 1
    %306 = vsyncpa [#allocation5], 1
    %307 = vsyncpa [#allocation11], 1

</llo_original>
